<compile_context>
chip_gen: v5e
topology: v5e:2x2
jax: 0.10.0
libtpu: 0.0.40
codegen_flags: <defaults>
</compile_context>

<pallas_src>
import jax
import jax.numpy as jnp
import numpy as np
from jax.experimental import pallas as pl
from jax.experimental.pallas import tpu as pltpu


def _round_up(x, m):
    return ((x + m - 1) // m) * m


# ----------------------------- Pallas kernels -----------------------------

def _grouped_ffn_kernel(_tile_eid_ref, x_ref, w1_ref, wg_ref, w2_ref,
                        o_ref, acc_ref):
    """SwiGLU expert FFN on one row tile; accumulates over the H grid axis."""
    h = pl.program_id(1)

    @pl.when(h == 0)
    def _():
        acc_ref[...] = jnp.zeros_like(acc_ref)

    x = x_ref[...]                                       # (tm, D)
    w1 = w1_ref[0]                                       # (D, th)
    wg = wg_ref[0]                                       # (D, th)
    w2 = w2_ref[0]                                       # (th, D)

    h1 = jnp.dot(x, w1, preferred_element_type=jnp.float32)
    h1 = h1 * jax.nn.sigmoid(h1)                         # SiLU
    h2 = jnp.dot(x, wg, preferred_element_type=jnp.float32)
    hh = (h1 * h2).astype(w2.dtype)
    acc_ref[...] += jnp.dot(hh, w2, preferred_element_type=jnp.float32)

    @pl.when(h == pl.num_programs(1) - 1)
    def _():
        o_ref[...] = acc_ref[...].astype(o_ref.dtype)


def grouped_expert_ffn(x_rows, w1, wg, w2, tile_eid, *, tm, th=None):
    """Grouped expert FFN.

    x_rows:   (A_pad, D)  gathered rows, grouped contiguously by expert,
              each expert group padded with zero rows to a multiple of tm.
    w1, wg:   (E, D, H);  w2: (E, H, D).
    tile_eid: (A_pad // tm,) int32, expert id owning each row tile.
    """
    A_pad, D = x_rows.shape
    E, _, H = w1.shape
    if th is None:
        th = H
    assert A_pad % tm == 0, (A_pad, tm)
    assert H % th == 0 and (th == H or th % 128 == 0), (H, th)
    n_tiles = A_pad // tm
    n_h = H // th
    assert tile_eid.shape == (n_tiles,), (tile_eid.shape, n_tiles)

    # Padding-aware VMEM budget: double-buffered x/out/weight blocks, fp32
    # accumulator and the three (tm, th) fp32 intermediates.  Capped at 64 MiB
    # so the request is valid on v7x as well as v5e/v6e.
    bpe = x_rows.dtype.itemsize
    wbpe = w1.dtype.itemsize
    Dl, thl = _round_up(D, 128), _round_up(th, 128)
    est = (2 * tm * Dl * bpe                       # x blocks
           + 2 * tm * Dl * bpe                     # out blocks
           + 2 * 2 * _round_up(D, 8) * thl * wbpe  # w1 + wgate blocks
           + 2 * _round_up(th, 8) * Dl * wbpe      # w2 blocks
           + tm * Dl * 4                           # fp32 accumulator
           + 3 * tm * thl * 4)                     # h1 / h2 / hh
    vmem_limit = int(min(64 * 1024 * 1024,
                         max(32 * 1024 * 1024, est + (8 << 20))))

    return pl.pallas_call(
        _grouped_ffn_kernel,
        out_shape=jax.ShapeDtypeStruct((A_pad, D), x_rows.dtype),
        grid_spec=pltpu.PrefetchScalarGridSpec(
            num_scalar_prefetch=1,
            grid=(n_tiles, n_h),
            in_specs=[
                pl.BlockSpec((tm, D), lambda t, h, te: (t, 0)),
                pl.BlockSpec((1, D, th), lambda t, h, te: (te[t], 0, h)),
                pl.BlockSpec((1, D, th), lambda t, h, te: (te[t], 0, h)),
                pl.BlockSpec((1, th, D), lambda t, h, te: (te[t], h, 0)),
            ],
            out_specs=pl.BlockSpec((tm, D), lambda t, h, te: (t, 0)),
            scratch_shapes=[pltpu.VMEM((tm, D), jnp.float32)],
        ),
        compiler_params=pltpu.CompilerParams(
            dimension_semantics=("parallel", "arbitrary"),
            vmem_limit_bytes=vmem_limit),
    )(tile_eid, x_rows, w1, wg, w2)


def _gate_kernel(x_ref, wg_ref, b_ref, o_ref):
    """Gate linear (with bias) + softmax over the (padded) routed-expert axis."""
    logits = jnp.dot(x_ref[...], wg_ref[...],
                     preferred_element_type=jnp.float32) + b_ref[...]
    m = jnp.max(logits, axis=-1, keepdims=True)
    ez = jnp.exp(logits - m)
    o_ref[...] = (ez / jnp.sum(ez, axis=-1, keepdims=True)).astype(o_ref.dtype)


def gate_softmax(x, gate_w, gate_b, *, tm):
    """x: (T, D) in its native dtype (no host-side upcast); output f32 probas."""
    T, D = x.shape
    Er = gate_w.shape[1]
    assert T % tm == 0, (T, tm)
    # Pad routed-expert axis to a lane-dense multiple of 128; padded columns
    # get a -1e30 bias so exp(.) == 0 and the softmax is unaffected.
    Ep = _round_up(Er, 128)
    gw = jnp.pad(gate_w.astype(x.dtype), ((0, 0), (0, Ep - Er)))
    gb = jnp.pad(gate_b.astype(jnp.float32), (0, Ep - Er),
                 constant_values=-1e30).reshape(1, Ep)
    out = pl.pallas_call(
        _gate_kernel,
        out_shape=jax.ShapeDtypeStruct((T, Ep), jnp.float32),
        grid_spec=pltpu.PrefetchScalarGridSpec(
            num_scalar_prefetch=0,
            grid=(T // tm,),
            in_specs=[
                pl.BlockSpec((tm, D), lambda i: (i, 0)),
                pl.BlockSpec((D, Ep), lambda i: (0, 0)),
                pl.BlockSpec((1, Ep), lambda i: (0, 0)),
            ],
            out_specs=pl.BlockSpec((tm, Ep), lambda i: (i, 0)),
        ),
        compiler_params=pltpu.CompilerParams(
            dimension_semantics=("parallel",)),
    )(x, gw, gb)
    return out[:, :Er]


# ------------------------------ MoE wrapper -------------------------------

def deepseek_moe_forward(x, params, *, num_shared, top_k,
                         bias_update_rate=0.001, tm=256, th=None,
                         compute_dtype=None):
    """Mirrors DeepSeekMoE.forward. Returns (output, new_biases, max_vio)."""
    B, S, D = x.shape
    T = B * S
    xt = x.reshape(T, D)
    ns = num_shared
    Er = params["gate_w"].shape[1]                     # routed experts
    E = params["w1"].shape[0]                          # shared + routed stacked
    assert E == ns + Er

    # ---- Gating: linear + softmax (Pallas kernel); top-k routing is JAX glue.
    tm_g = min(tm, _round_up(T, 16))
    Tg = _round_up(T, tm_g)
    x_gate = jnp.pad(xt, ((0, Tg - T), (0, 0))) if Tg != T else xt
    probas = gate_softmax(x_gate, params["gate_w"], params["gate_b"],
                          tm=tm_g)[:T]                               # (T, Er)
    biased = probas + params["biases"]
    _, topk_idx = jax.lax.top_k(biased, top_k)                       # (T, k)
    topk_p = jnp.take_along_axis(probas, topk_idx, axis=-1)
    topk_p = topk_p / jnp.sum(topk_p, axis=-1, keepdims=True)

    # ---- Grouped-GEMM routing glue: expand to (shared + top_k) assignments,
    # sort by expert, pad each expert group to a multiple of the row tile.
    tm_e = min(tm, _round_up(T, 16))
    A = T * (ns + top_k)
    shared_e = jnp.broadcast_to(jnp.arange(ns, dtype=jnp.int32)[None, :],
                                (T, ns))
    routed_e = (topk_idx + ns).astype(jnp.int32)
    flat_e = jnp.concatenate([shared_e, routed_e], axis=1).reshape(-1)  # (A,)
    flat_w = jnp.concatenate(
        [jnp.ones((T, ns), jnp.float32), topk_p.astype(jnp.float32)],
        axis=1).reshape(-1)                                             # (A,)
    flat_t = jnp.broadcast_to(jnp.arange(T, dtype=jnp.int32)[:, None],
                              (T, ns + top_k)).reshape(-1)              # (A,)

    order = jnp.argsort(flat_e)                        # stable by default
    sorted_e = flat_e[order]
    sorted_t = flat_t[order]
    sorted_w = flat_w[order]

    counts_all = jnp.bincount(flat_e, length=E).astype(jnp.int32)       # (E,)
    padded = (((counts_all + tm_e - 1) // tm_e) * tm_e).astype(jnp.int32)
    starts = jnp.cumsum(counts_all) - counts_all       # unpadded group starts
    pstarts = jnp.cumsum(padded) - padded              # padded group starts
    rank = jnp.arange(A, dtype=jnp.int32) - starts[sorted_e]
    dest = pstarts[sorted_e] + rank                    # position in padded buf

    # Static tile count: sum_e round_up(c_e, tm) <= A + E*(tm-1).
    n_tiles = (A + E * (tm_e - 1)) // tm_e
    A_pad = n_tiles * tm_e
    tok_map = jnp.full((A_pad,), T, jnp.int32).at[dest].set(sorted_t)
    w_pad = jnp.zeros((A_pad,), jnp.float32).at[dest].set(sorted_w)
    bounds = jnp.cumsum(padded)
    tile_eid = jnp.minimum(
        jnp.searchsorted(bounds, jnp.arange(n_tiles, dtype=jnp.int32) * tm_e,
                         side="right"),
        E - 1).astype(jnp.int32)

    # ---- Expert FFNs: one grouped Pallas call. Optional bf16 operands for
    # v6e/v7x MXU throughput; fp32 accumulation stays inside the kernel.
    w1, wg, w2 = params["w1"], params["wgate"], params["w2"]
    xk = xt
    if compute_dtype is not None:
        xk = xk.astype(compute_dtype)
        w1, wg, w2 = (w.astype(compute_dtype) for w in (w1, wg, w2))
    # Gather rows into expert-grouped order; index T is an appended zero row
    # (padding / dead tiles compute exact zeros and are discarded below).
    x_rows = jnp.concatenate([xk, jnp.zeros((1, D), xk.dtype)], axis=0)[tok_map]
    y = grouped_expert_ffn(x_rows, w1, wg, w2, tile_eid, tm=tm_e, th=th)

    # ---- Weighted scatter-add back to token order (JAX glue, fp32 combine).
    out = jnp.zeros((T + 1, D), jnp.float32).at[tok_map].add(
        y.astype(jnp.float32) * w_pad[:, None])[:T]

    # ---- Load-balancing stats / aux-loss-free bias update (module side
    # effects): counts = assignments per routed expert.
    counts = counts_all[ns:].astype(jnp.float32)
    vio_error = jnp.mean(counts) - counts
    new_biases = params["biases"] + bias_update_rate * jnp.sign(vio_error)
    max_vio = (jnp.max(counts) - jnp.mean(counts)) / jnp.mean(counts)

    return out.reshape(B, S, D).astype(x.dtype), new_biases, max_vio


# ------------------------- pure-JAX reference ------------------------------

def _expert_ref(x, w1, wg, w2):
    a = x @ w1
    a = a * jax.nn.sigmoid(a)
    return (a * (x @ wg)) @ w2


def reference_forward(x, params, *, num_shared, top_k):
    B, S, D = x.shape
    xt = x.reshape(-1, D)
    num_routed = params["gate_w"].shape[1]
    out = jnp.zeros_like(xt)
    for s in range(num_shared):
        out = out + _expert_ref(xt, params["w1"][s], params["wgate"][s],
                                params["w2"][s])
    logits = xt @ params["gate_w"] + params["gate_b"]
    probas = jax.nn.softmax(logits, axis=-1)
    biased = probas + params["biases"]
    _, topk_idx = jax.lax.top_k(biased, top_k)
    topk_p = jnp.take_along_axis(probas, topk_idx, axis=-1)
    topk_p = topk_p / jnp.sum(topk_p, axis=-1, keepdims=True)
    for e in range(num_routed):
        sel = (topk_idx == e)
        mask = jnp.any(sel, axis=-1)
        ew = jnp.sum(topk_p * sel, axis=-1)
        ei = num_shared + e
        y = _expert_ref(xt, params["w1"][ei], params["wgate"][ei],
                        params["w2"][ei]) * ew[:, None]
        out = out + jnp.where(mask[:, None], y, 0.0)
    return out.reshape(B, S, D)


# --------------------------------- main ------------------------------------

if __name__ == "__main__":
    # Config (cfg = {'emb_dim': 32, 'hidden_dim': 64, 'dtype': float32})
    emb_dim, hidden_dim = 32, 64
    num_experts, num_shared, top_k = 8, 1, 3
    num_routed = num_experts - num_shared
    scaling_factor = 1.0 / (top_k + num_shared)       # 'auto'
    H = int(scaling_factor * hidden_dim)              # 16
    E = num_experts                                   # shared + routed stacked

    batch, seq = 2, 8
    key = jax.random.PRNGKey(0)
    k_x, k_w1, k_wg, k_w2, k_gw, k_gb = jax.random.split(key, 6)

    x = jax.random.normal(k_x, (batch, seq, emb_dim), dtype=jnp.float32)
    params = {
        "w1":    0.05 * jax.random.normal(k_w1, (E, emb_dim, H), jnp.float32),
        "wgate": 0.05 * jax.random.normal(k_wg, (E, emb_dim, H), jnp.float32),
        "w2":    0.05 * jax.random.normal(k_w2, (E, H, emb_dim), jnp.float32),
        "gate_w": 0.05 * jax.random.normal(k_gw, (emb_dim, num_routed), jnp.float32),
        "gate_b": 0.05 * jax.random.normal(k_gb, (num_routed,), jnp.float32),
        "biases": jnp.zeros((num_routed,), jnp.float32),
    }

    # fp32 path: exact comparison against the pure-JAX reference.
    out, new_biases, max_vio = deepseek_moe_forward(
        x, params, num_shared=num_shared, top_k=top_k)
    out = jax.block_until_ready(out)
    jax.block_until_ready((new_biases, max_vio))

    ref = reference_forward(x, params, num_shared=num_shared, top_k=top_k)
    np.testing.assert_allclose(np.asarray(out), np.asarray(ref),
                               rtol=1e-4, atol=1e-4)

    # bf16 operand path (fp32 accumulation + fp32 weighted combine) -- loose
    # tolerance vs the fp32 reference.
    out_bf16, _, _ = deepseek_moe_forward(
        x, params, num_shared=num_shared, top_k=top_k,
        compute_dtype=jnp.bfloat16)
    out_bf16 = jax.block_until_ready(out_bf16)
    np.testing.assert_allclose(np.asarray(out_bf16), np.asarray(ref),
                               rtol=5e-2, atol=2e-2)

    # TODO(synk): top-k selection, token sort / group-offset construction, and
    # the weighted scatter-add combine stay in JAX glue (data-dependent
    # gather/scatter), not in the Pallas kernels.
    print("KERNEL_OK")
</pallas_src>

<mosaic_0001>
module attributes {stable_mosaic.version = 11 : i64} {
  func.func @_gate_kernel(%arg0: i32, %arg1: memref<16x32xf32, #tpu.memory_space<vmem>>, %arg2: memref<32x128xf32, #tpu.memory_space<vmem>>, %arg3: memref<1x128xf32, #tpu.memory_space<vmem>>, %arg4: memref<16x128xf32, #tpu.memory_space<vmem>>) attributes {dimension_semantics = [#tpu.dimension_semantics<parallel>], iteration_bounds = array<i64: 1>, scalar_prefetch = 0 : i64, scratch_operands = 0 : i64, tpu.core_type = #tpu.core_type<tc>, window_params = [{transform_indices = @transform_0, window_bounds = array<i64: 16, 32>}, {pipeline_mode = #tpu.pipeline_mode<synchronous>, transform_indices = @transform_1, window_bounds = array<i64: 32, 128>}, {pipeline_mode = #tpu.pipeline_mode<synchronous>, transform_indices = @transform_2, window_bounds = array<i64: 1, 128>}, {transform_indices = @transform_3, window_bounds = array<i64: 16, 128>}]} {
    %c0 = arith.constant 0 : index
    %c0_0 = arith.constant 0 : index
    %0 = vector.load %arg1[%c0, %c0_0] : memref<16x32xf32, #tpu.memory_space<vmem>>, vector<16x32xf32>
    %c0_1 = arith.constant 0 : index
    %c0_2 = arith.constant 0 : index
    %1 = vector.load %arg2[%c0_1, %c0_2] : memref<32x128xf32, #tpu.memory_space<vmem>>, vector<32x128xf32>
    %cst = arith.constant dense<0.000000e+00> : vector<16x128xf32>
    %2 = tpu.matmul %0, %1, %cst {dimension_numbers = #tpu.dot_dimension_numbers<[1], [0], [0], [1], [0, 0, 1, 1], [], []>} : vector<16x32xf32>, vector<32x128xf32>, vector<16x128xf32> -> vector<16x128xf32>
    %c0_3 = arith.constant 0 : index
    %c0_4 = arith.constant 0 : index
    %3 = vector.load %arg3[%c0_3, %c0_4] : memref<1x128xf32, #tpu.memory_space<vmem>>, vector<1x128xf32>
    %4 = vector.broadcast %3 : vector<1x128xf32> to vector<16x128xf32>
    %5 = arith.addf %2, %4 : vector<16x128xf32>
    %cst_5 = arith.constant dense<0xFF800000> : vector<16xf32>
    %6 = vector.multi_reduction <maximumf>, %5, %cst_5 [1] : vector<16x128xf32> to vector<16xf32>
    %7 = vector.shape_cast %6 : vector<16xf32> to vector<16x1xf32>
    %8 = vector.broadcast %7 : vector<16x1xf32> to vector<16x128xf32>
    %9 = arith.subf %5, %8 : vector<16x128xf32>
    %10 = math.exp %9 : vector<16x128xf32>
    %cst_6 = arith.constant dense<0.000000e+00> : vector<16xf32>
    %11 = vector.multi_reduction <add>, %10, %cst_6 [1] : vector<16x128xf32> to vector<16xf32>
    %12 = vector.shape_cast %11 : vector<16xf32> to vector<16x1xf32>
    %13 = vector.broadcast %12 : vector<16x1xf32> to vector<16x128xf32>
    %14 = arith.divf %10, %13 : vector<16x128xf32>
    %c0_7 = arith.constant 0 : index
    %c0_8 = arith.constant 0 : index
    %15 = vector.load %arg4[%c0_7, %c0_8] : memref<16x128xf32, #tpu.memory_space<vmem>>, vector<16x128xf32>
    tpu.vector_store %arg4[%c0_7, %c0_8], %14 {strides = array<i32>} : memref<16x128xf32, #tpu.memory_space<vmem>>, vector<16x128xf32>,
    return
  }
  func.func @transform_0(%arg0: i32) -> (i32, i32) {
    %c0_i32 = arith.constant 0 : i32
    %c0_i32_0 = arith.constant 0 : i32
    return %arg0, %c0_i32 : i32, i32
  }
  func.func @transform_1(%arg0: i32) -> (i32, i32) {
    %c0_i32 = arith.constant 0 : i32
    %c0_i32_0 = arith.constant 0 : i32
    %c0_i32_1 = arith.constant 0 : i32
    return %c0_i32, %c0_i32_0 : i32, i32
  }
  func.func @transform_2(%arg0: i32) -> (i32, i32) {
    %c0_i32 = arith.constant 0 : i32
    %c0_i32_0 = arith.constant 0 : i32
    %c0_i32_1 = arith.constant 0 : i32
    return %c0_i32, %c0_i32_0 : i32, i32
  }
  func.func @transform_3(%arg0: i32) -> (i32, i32) {
    %c0_i32 = arith.constant 0 : i32
    %c0_i32_0 = arith.constant 0 : i32
    return %arg0, %c0_i32 : i32, i32
  }
}

</mosaic_0001>

<llo_original>
// kernel: tpu_custom_call.1
$region0: #{tpu_custom_call.1}
  #allocation0 [shape = 'u32[]', space=smem, size = 0x4, offset = 0x4, fixed_abs, tag = 'smem constant byte address 0x4 - core index']
  #allocation1 [shape = 'u32[72,128]{1,0:T(1,128)}', space=vmem, size = 0x9000, scoped, tag = 'internal scratch']
  %s0 = inlined_call_operand.hbm [shape: f32[16,32], index: 0, kind: input, shape index: {}]
  %s1 = inlined_call_operand.hbm [shape: f32[32,128], index: 1, kind: input, shape index: {}]
  %s2 = inlined_call_operand.vmem [shape: f32[1,128], index: 2, kind: input, shape index: {}]
  %s3 = inlined_call_operand.hbm [shape: f32[16,128], index: 3, kind: output, shape index: {}]
  %s4 = sld [smem:[#allocation0]]
  $region30: #{tpu_custom_call.1} parent=0
    _
  %s6 = ssub.s32 1, %s4
  %s7 = scalar_select 0, %s6, %s4
  $region1: #{tpu_custom_call.1} parent=0
    #allocation2 [shape = 'u8[8192]{0}', space=vmem, size = 0x2000, scoped, tag = 'input window, operand 0, single buffered']
    #allocation3 [shape = 's32[1]{0}', space=sflag, size = 0x4, scoped, tag = 'scoped memory for tpu_custom_call.1']
    #allocation4 [shape = 's32[1]{0}', space=sflag, size = 0x4, scoped, tag = 'scoped memory for tpu_custom_call.1']
    #allocation5 [shape = 'u8[16384]{0}', space=vmem, size = 0x4000, scoped, tag = 'input window, operand 1, single buffered']
    #allocation6 [shape = 's32[1]{0}', space=sflag, size = 0x4, scoped, tag = 'scoped memory for tpu_custom_call.1']
    #allocation7 [shape = 'u8[8192]{0}', space=vmem, size = 0x2000, scoped, tag = 'output window, operand 0, single buffered']
    %8 = vsyncpa [#allocation3], 0
    %9 = vsyncpa [#allocation6], 0
    %10 = vsyncpa [#allocation4], 0
    // Predicated region
    $region2: #{tpu_custom_call.1} parent=1 // pred_check
      _
    $region3: #{tpu_custom_call.1} parent=1 // pred_check_branch
      %12 = sbr.rel (0) target = $region5
    $region4: #{tpu_custom_call.1} parent=1 // pred_region
      %14 = vsyncadd [#allocation3], 0
      %s15 = sshll.u32 %s0, 4
      %s16 = int_to_ptr.hbm [resolvable:$true] %s15
      %s17 = sshll.u32 [#allocation2], 4
      %s18 = int_to_ptr.vmem [resolvable:$true] %s17
      %23 = dma.hbm_to_vmem [thread:$0]  %s16, 256, %s18, [#allocation3], 128, 128, 8
    $region5: #{tpu_custom_call.1} parent=1 // pred_fallthru
      _
    // Predicated region
    $region6: #{tpu_custom_call.1} parent=1 // pred_check
      _
    $region7: #{tpu_custom_call.1} parent=1 // pred_check_branch
      %25 = sbr.rel (0) target = $region9
    $region8: #{tpu_custom_call.1} parent=1 // pred_region
      %27 = vsyncadd [#allocation6], 0
      %s28 = sshll.u32 %s1, 4
      %s29 = int_to_ptr.hbm [resolvable:$true] %s28
      %s30 = sshll.u32 [#allocation5], 4
      %s31 = int_to_ptr.vmem [resolvable:$true] %s30
      %36 = dma.hbm_to_vmem [thread:$0]  %s29, 512, %s31, [#allocation6], 128, 128, 8
    $region9: #{tpu_custom_call.1} parent=1 // pred_fallthru
      _
    // Predicated region
    $region10: #{tpu_custom_call.1} parent=1 // pred_check
      _
    $region11: #{tpu_custom_call.1} parent=1 // pred_check_branch
      %38 = sbr.rel (0) target = $region13
    $region12: #{tpu_custom_call.1} parent=1 // pred_region
      _
    $region13: #{tpu_custom_call.1} parent=1 // pred_fallthru
      _
    // Predicated region
    $region14: #{tpu_custom_call.1} parent=1 // pred_check
      _
    $region15: #{tpu_custom_call.1} parent=1 // pred_check_branch
      %40 = sbr.rel (0) target = $region17
    $region16: #{tpu_custom_call.1} parent=1 // pred_region
      %42 = dma.done [#allocation3], 256
    $region17: #{tpu_custom_call.1} parent=1 // pred_fallthru
      _
    // Predicated region
    $region18: #{tpu_custom_call.1} parent=1 // pred_check
      _
    $region19: #{tpu_custom_call.1} parent=1 // pred_check_branch
      %44 = sbr.rel (0) target = $region21
    $region20: #{tpu_custom_call.1} parent=1 // pred_region
      %46 = dma.done [#allocation6], 512
    $region21: #{tpu_custom_call.1} parent=1 // pred_fallthru
      _
    %v47 = vld [vmem:[#allocation2] sm:$0xff]
    %v48 = vld [vmem:[#allocation2 + $0x8] sm:$0xff]
    %v49 = vld [vmem:[#allocation5] sm:$0xff]
    %v50 = vld [vmem:[#allocation5 + $0x8] sm:$0xff]
    %v51 = vld [vmem:[#allocation5 + $0x10] sm:$0xff]
    %v52 = vld [vmem:[#allocation5 + $0x18] sm:$0xff]
    %v53 = vld [vmem:[%s2] sm:$0x1]
    %v55 = vperm.slane %v53, 0
    %vm57 = vcmask 261120
    %v59 = vsel %vm57, %v47, 0
    %v62 = vsel %vm57, %v48, 0
    %64 = vmatpush.msra.mxu0 0.0
    %65 = vmatpush.msra.mxu0 0.0
    %66 = vmatpush.msra.mxu0 0.0
    %67 = vmatpush.msra.mxu0 0.0
    %68 = vmatpush.msra.mxu0 0.0
    %69 = vmatpush.msra.mxu0 0.0
    %70 = vmatpush.msra.mxu0 0.0
    %71 = vmatpush.msra.mxu0 0.0
    %72 = vmatpush.msra.mxu0 0.0
    %73 = vmatpush.msra.mxu0 0.0
    %74 = vmatpush.msra.mxu0 0.0
    %75 = vmatpush.msra.mxu0 0.0
    %76 = vmatpush.msra.mxu0 %v52
    %77 = vmatpush.msra.mxu0 %v51
    %78 = vmatpush.msra.mxu0 %v50
    %79 = vmatpush.msra.mxu0 %v49
    %80 = vmatmul.f32.gmra.mxu0 %v59
    %v81 = vpop.f32.mrf.mxu0
    %v82 = vadd.f32 %v55, %v81
    %83 = vmatmul.f32.gmra.mxu0 %v62
    %v84 = vpop.f32.mrf.mxu0
    %v85 = vadd.f32 %v55, %v84
    %86 = vdwg.mxu0
    %87 = vmax.xlane.f32.xlu0 %v82
    %v88 = vpop.xlane.xlu0 %87
    %89 = vmax.xlane.f32.xlu0 %v85
    %v90 = vpop.xlane.xlu0 %89
    %v91 = vsub.f32 %v82, %v88
    %v92 = vsub.f32 %v85, %v90
    %v93 = vmul.f32 %v91, 1.442695
    %v94 = vpow.pop %v93
    %v95 = vmul.f32 %v92, 1.442695
    %v96 = vpow.pop %v95
    %97 = vadd.xlane.f32.xlu0 %v94
    %v98 = vpop.xlane.xlu0 %97
    %99 = vadd.xlane.f32.xlu0 %v96
    %v100 = vpop.xlane.xlu0 %99
    %v101 = vrcp.pop %v98
    %v102 = vmul.f32 %v98, %v101
    %v103 = vsub.f32 1.0, %v102
    %v104 = vmul.f32 %v101, %v103
    %v105 = vadd.f32 %v101, %v104
    %vm106 = vweird.f32 %v98
    %vm107 = vweird.f32 %v101
    %vm108 = vmor %vm106, %vm107
    %v109 = vsel %vm108, %v101, %v105
    %v110 = vand.u32 2147483647, %v98
    %vm111 = vcmp.eq.f32.partialorder %v110, 8.507059e+37
    %v112 = vand.u32 %v98, 2147483648
    %v113 = vor.u32 1.1754944e-38, %v112
    %v114 = vsel %vm111, %v113, %v109
    %v115 = vmul.f32 %v94, %v114
    %v116 = vrcp.pop %v100
    %v117 = vmul.f32 %v100, %v116
    %v118 = vsub.f32 1.0, %v117
    %v119 = vmul.f32 %v116, %v118
    %v120 = vadd.f32 %v116, %v119
    %vm121 = vweird.f32 %v100
    %vm122 = vweird.f32 %v116
    %vm123 = vmor %vm121, %vm122
    %v124 = vsel %vm123, %v116, %v120
    %v125 = vand.u32 2147483647, %v100
    %vm126 = vcmp.eq.f32.partialorder %v125, 8.507059e+37
    %v127 = vand.u32 %v100, 2147483648
    %v128 = vor.u32 1.1754944e-38, %v127
    %v129 = vsel %vm126, %v128, %v124
    %v130 = vmul.f32 %v96, %v129
    %131 = vst [vmem:[#allocation7] sm:$0xff] %v115
    %132 = vst [vmem:[#allocation7 + $0x8] sm:$0xff] %v130
    // Predicated region
    $region22: #{tpu_custom_call.1} parent=1 // pred_check
      _
    $region23: #{tpu_custom_call.1} parent=1 // pred_check_branch
      %134 = sbr.rel (0) target = $region25
    $region24: #{tpu_custom_call.1} parent=1 // pred_region
      %136 = vsyncadd [#allocation4], 0
      %s137 = sshll.u32 [#allocation7], 4
      %s138 = int_to_ptr.vmem [resolvable:$true] %s137
      %s139 = sshll.u32 %s3, 4
      %s140 = int_to_ptr.hbm [resolvable:$true] %s139
      %145 = dma.vmem_to_hbm [thread:$0]  %s138, 256, %s140, [#allocation4], 128, 128, 8
    $region25: #{tpu_custom_call.1} parent=1 // pred_fallthru
      _
    // Predicated region
    $region26: #{tpu_custom_call.1} parent=1 // pred_check
      _
    $region27: #{tpu_custom_call.1} parent=1 // pred_check_branch
      %147 = sbr.rel (0) target = $region29
    $region28: #{tpu_custom_call.1} parent=1 // pred_region
      %149 = dma.done [#allocation4], 256
    $region29: #{tpu_custom_call.1} parent=1 // pred_fallthru
      _
    %150 = vsyncpa [#allocation3], 1
    %151 = vsyncpa [#allocation6], 1
    %152 = vsyncpa [#allocation4], 1

</llo_original>
